<compile_context>
chip_gen: v5e
topology: v5e:2x2
jax: 0.10.0
libtpu: 0.0.40
codegen_flags: <defaults>
</compile_context>

<pallas_src>
import functools

import jax
import jax.numpy as jnp
from jax import lax
from jax.experimental import pallas as pl
from jax.experimental.pallas import tpu as pltpu

_NEG_MASK = -1e30  # bias for padded output columns -> softmax prob exactly 0


# ---------------------------------------------------------------------------
# Pass A: input projection  z_x = x @ Wx + b_h   (time-parallel)
# ---------------------------------------------------------------------------
def x_proj_kernel(x_ref, w_xh_ref, b_h_ref, zx_ref):
    cdt = w_xh_ref.dtype
    zx_ref[...] = (jnp.dot(x_ref[...].astype(cdt), w_xh_ref[...],
                           preferred_element_type=jnp.float32)
                   + b_h_ref[...])


# ---------------------------------------------------------------------------
# Pass B: the recurrence  h_t = tanh(z_x[t] + h_{t-1} @ Wh)   (serial)
# ---------------------------------------------------------------------------
def recurrent_kernel(zx_ref, h0_ref, w_hh_ref, h_seq_ref, h_scr, *, bp, tt):
    chunk = pl.program_id(0)

    @pl.when(chunk == 0)
    def _():
        h_scr[...] = h0_ref[...]

    cdt = w_hh_ref.dtype  # MXU operand dtype (f32 or bf16); accumulate in f32

    def step(i, h):
        r = pl.multiple_of(i * bp, bp)
        z = zx_ref[pl.ds(r, bp), :] + jnp.dot(
            h.astype(cdt), w_hh_ref[...], preferred_element_type=jnp.float32)
        h_new = jnp.tanh(z)                                   # f32, (bp, Hp)
        h_seq_ref[pl.ds(r, bp), :] = h_new.astype(h_seq_ref.dtype)
        return h_new

    # Unrolled so the LLO scheduler sees the whole chunk.
    h_scr[...] = lax.fori_loop(0, tt, step, h_scr[...], unroll=True)


# ---------------------------------------------------------------------------
# Pass C: output projection + softmax   (time-parallel)
# ---------------------------------------------------------------------------
def out_proj_kernel(h_ref, w_ho_ref, b_o_ref, probs_ref):
    cdt = w_ho_ref.dtype
    logits = (jnp.dot(h_ref[...].astype(cdt), w_ho_ref[...],
                      preferred_element_type=jnp.float32) + b_o_ref[...])
    m = jnp.max(logits, axis=-1, keepdims=True)
    e = jnp.exp(logits - m)
    # Exact divide (NOT the approximate reciprocal): probs must sum to 1.
    probs_ref[...] = (e / jnp.sum(e, axis=-1, keepdims=True)
                      ).astype(probs_ref.dtype)


def _round_up(n, m):
    return ((n + m - 1) // m) * m


@functools.partial(jax.jit, static_argnames=("param_dtype", "time_chunk"))
def rnn_forward_sequence(x_seq, h0, params, *, param_dtype=jnp.float32,
                         time_chunk=8):
    """Run the RNN cell over a (T, B, input) sequence.

    Returns (probs: (T, B, output), h_final: (B, hidden)).
    """
    wx, wh, bh, wo, bo = params
    t_len, b, i = x_seq.shape
    h = wh.shape[0]
    o = wo.shape[1]
    f32 = jnp.float32

    bp = _round_up(max(b, 8), 8)          # f32 sublane multiple
    hp = _round_up(max(h, 128), 128)      # lane multiple (MXU-friendly)
    op = _round_up(max(o, 128), 128)      # lane-dense probs stores
    tt = max(1, min(time_chunk, t_len))   # timesteps per grid step
    tp = _round_up(t_len, tt)             # padded sequence length
    n_chunks = tp // tt
    mc = tt * bp                          # rows per chunk in the 2-D layout

    # --- pad / pack parameters (weights optionally bf16, biases f32) --------
    wx_p = jnp.zeros((i, hp), f32).at[:, :h].set(wx).astype(param_dtype)
    wh_p = jnp.zeros((hp, hp), f32).at[:h, :h].set(wh).astype(param_dtype)
    bh_p = jnp.zeros((1, hp), f32).at[0, :h].set(bh)
    wo_p = jnp.zeros((hp, op), f32).at[:h, :o].set(wo).astype(param_dtype)
    bo_p = jnp.full((1, op), _NEG_MASK, f32).at[0, :o].set(bo)

    # --- pad activations; keep streams 2-D (time*batch, feature) ------------
    x_p = (jnp.zeros((tp, bp, i), f32).at[:t_len, :b, :].set(x_seq)
           .reshape(tp * bp, i))
    h0_p = jnp.zeros((bp, hp), f32).at[:b, :h].set(h0)

    const = lambda shape: pl.BlockSpec(shape, lambda c: (0,) * len(shape))
    stream = lambda cols: pl.BlockSpec((mc, cols), lambda c: (c, 0))

    # Pass A: z_x = x @ Wx + b_h  (one MXU-efficient matmul per chunk).
    zx = pl.pallas_call(
        x_proj_kernel,
        out_shape=jax.ShapeDtypeStruct((tp * bp, hp), f32),
        grid=(n_chunks,),
        in_specs=[stream(i), const((i, hp)), const((1, hp))],
        out_specs=stream(hp),
        compiler_params=pltpu.CompilerParams(
            dimension_semantics=("parallel",)),
    )(x_p, wx_p, bh_p)

    # Pass B: the recurrence (sequential chunks, h carried in VMEM scratch,
    # Wh/h0 resident via constant index_maps).
    h_seq = pl.pallas_call(
        functools.partial(recurrent_kernel, bp=bp, tt=tt),
        out_shape=jax.ShapeDtypeStruct((tp * bp, hp), f32),
        grid=(n_chunks,),
        in_specs=[stream(hp), const((bp, hp)), const((hp, hp))],
        out_specs=stream(hp),
        scratch_shapes=[pltpu.VMEM((bp, hp), f32)],
        compiler_params=pltpu.CompilerParams(
            dimension_semantics=("arbitrary",)),
    )(zx, h0_p, wh_p)

    # Pass C: probs = softmax(h @ Wo + b_o)  (time-parallel).
    probs_p = pl.pallas_call(
        out_proj_kernel,
        out_shape=jax.ShapeDtypeStruct((tp * bp, op), f32),
        grid=(n_chunks,),
        in_specs=[stream(hp), const((hp, op)), const((1, op))],
        out_specs=stream(op),
        compiler_params=pltpu.CompilerParams(
            dimension_semantics=("parallel",)),
    )(h_seq, wo_p, bo_p)

    probs = probs_p.reshape(tp, bp, op)[:t_len, :b, :o]
    h_final = h_seq.reshape(tp, bp, hp)[t_len - 1, :b, :h]
    return probs, h_final


def rnn_forward(inputs, hidden, params, **kw):
    """Single-step forward, matching the PyTorch module's forward()."""
    probs, h_new = rnn_forward_sequence(inputs[None], hidden, params, **kw)
    return probs[0], h_new


def init_params(key, input_size, hidden_size, output_size):
    """nn.Linear-style uniform(+/-1/sqrt(fan_in)) init; weights stored transposed."""
    k1, k2, k3, k4 = jax.random.split(key, 4)
    fan_i2h = input_size + hidden_size
    b1 = 1.0 / float(fan_i2h) ** 0.5
    w_i2h_t = jax.random.uniform(k1, (fan_i2h, hidden_size), jnp.float32, -b1, b1)
    wx = w_i2h_t[:input_size]            # (input, hidden)
    wh = w_i2h_t[input_size:]            # (hidden, hidden)
    bh = jax.random.uniform(k2, (hidden_size,), jnp.float32, -b1, b1)
    b2 = 1.0 / float(hidden_size) ** 0.5
    wo = jax.random.uniform(k3, (hidden_size, output_size), jnp.float32, -b2, b2)
    bo = jax.random.uniform(k4, (output_size,), jnp.float32, -b2, b2)
    return wx, wh, bh, wo, bo


def rnn_cell_reference(x, h, params):
    wx, wh, bh, wo, bo = params
    h_new = jnp.tanh(x @ wx + h @ wh + bh)
    logits = h_new @ wo + bo
    return jax.nn.softmax(logits, axis=-1), h_new


def rnn_sequence_reference(x_seq, h0, params):
    def step(h, x):
        p, h_new = rnn_cell_reference(x, h, params)
        return h_new, p
    h_final, probs = jax.lax.scan(step, h0, x_seq)
    return probs, h_final


if __name__ == "__main__":
    input_size, hidden_size, output_size = 16, 32, 8
    batch, seq_len = 2, 8

    key = jax.random.PRNGKey(0)
    kx, kp = jax.random.split(key)
    x_seq = jax.random.normal(kx, (seq_len, batch, input_size), jnp.float32)
    h0 = jnp.zeros((batch, hidden_size), jnp.float32)  # == initHidden() per row

    params = init_params(kp, input_size, hidden_size, output_size)

    # --- three-pass kernel, f32 weights (strict check) -----------------------
    probs, h_final = rnn_forward_sequence(x_seq, h0, params)
    probs = jax.block_until_ready(probs)
    h_final = jax.block_until_ready(h_final)

    ref_probs, ref_h = rnn_sequence_reference(x_seq, h0, params)
    assert probs.shape == (seq_len, batch, output_size)
    assert h_final.shape == (batch, hidden_size)
    assert jnp.allclose(h_final, ref_h, atol=1e-4, rtol=1e-4)
    assert jnp.allclose(probs, ref_probs, atol=1e-3, rtol=1e-3)
    # Exact softmax divide -> rows sum to 1 to fp32 precision.
    assert jnp.allclose(jnp.sum(probs, axis=-1), 1.0, atol=1e-4)

    # --- single-step call == the PyTorch module's forward() ------------------
    p1, h1 = rnn_forward(x_seq[0], h0, params)
    p1 = jax.block_until_ready(p1)
    rp1, rh1 = rnn_cell_reference(x_seq[0], h0, params)
    assert jnp.allclose(h1, rh1, atol=1e-4, rtol=1e-4)
    assert jnp.allclose(p1, rp1, atol=1e-3, rtol=1e-3)

    # --- bf16-weight path (MXU-native on v6e/v7x), f32 accumulation ----------
    probs_bf, h_bf = rnn_forward_sequence(x_seq, h0, params,
                                          param_dtype=jnp.bfloat16)
    probs_bf = jax.block_until_ready(probs_bf)
    assert jnp.allclose(probs_bf, ref_probs, atol=5e-2, rtol=5e-2)
    assert jnp.allclose(h_bf, ref_h, atol=5e-2, rtol=5e-2)

    print("KERNEL_OK")
</pallas_src>

<mosaic_0001>
module attributes {stable_mosaic.version = 11 : i64} {
  func.func @x_proj_kernel(%arg0: i32, %arg1: memref<64x16xf32, #tpu.memory_space<vmem>>, %arg2: memref<16x128xf32, #tpu.memory_space<vmem>>, %arg3: memref<1x128xf32, #tpu.memory_space<vmem>>, %arg4: memref<64x128xf32, #tpu.memory_space<vmem>>) attributes {dimension_semantics = [#tpu.dimension_semantics<parallel>], iteration_bounds = array<i64: 1>, scalar_prefetch = 0 : i64, scratch_operands = 0 : i64, tpu.core_type = #tpu.core_type<tc>, window_params = [{transform_indices = @transform_0, window_bounds = array<i64: 64, 16>}, {pipeline_mode = #tpu.pipeline_mode<synchronous>, transform_indices = @transform_1, window_bounds = array<i64: 16, 128>}, {pipeline_mode = #tpu.pipeline_mode<synchronous>, transform_indices = @transform_2, window_bounds = array<i64: 1, 128>}, {transform_indices = @transform_3, window_bounds = array<i64: 64, 128>}]} {
    %c0 = arith.constant 0 : index
    %c0_0 = arith.constant 0 : index
    %0 = vector.load %arg1[%c0, %c0_0] : memref<64x16xf32, #tpu.memory_space<vmem>>, vector<64x16xf32>
    %c0_1 = arith.constant 0 : index
    %c0_2 = arith.constant 0 : index
    %1 = vector.load %arg2[%c0_1, %c0_2] : memref<16x128xf32, #tpu.memory_space<vmem>>, vector<16x128xf32>
    %cst = arith.constant dense<0.000000e+00> : vector<64x128xf32>
    %2 = tpu.matmul %0, %1, %cst {dimension_numbers = #tpu.dot_dimension_numbers<[1], [0], [0], [1], [0, 0, 1, 1], [], []>} : vector<64x16xf32>, vector<16x128xf32>, vector<64x128xf32> -> vector<64x128xf32>
    %c0_3 = arith.constant 0 : index
    %c0_4 = arith.constant 0 : index
    %3 = vector.load %arg3[%c0_3, %c0_4] : memref<1x128xf32, #tpu.memory_space<vmem>>, vector<1x128xf32>
    %4 = vector.broadcast %3 : vector<1x128xf32> to vector<64x128xf32>
    %5 = arith.addf %2, %4 : vector<64x128xf32>
    %c0_5 = arith.constant 0 : index
    %c0_6 = arith.constant 0 : index
    %6 = vector.load %arg4[%c0_5, %c0_6] : memref<64x128xf32, #tpu.memory_space<vmem>>, vector<64x128xf32>
    tpu.vector_store %arg4[%c0_5, %c0_6], %5 {strides = array<i32>} : memref<64x128xf32, #tpu.memory_space<vmem>>, vector<64x128xf32>,
    return
  }
  func.func @transform_0(%arg0: i32) -> (i32, i32) {
    %c0_i32 = arith.constant 0 : i32
    %c0_i32_0 = arith.constant 0 : i32
    return %arg0, %c0_i32 : i32, i32
  }
  func.func @transform_1(%arg0: i32) -> (i32, i32) {
    %c0_i32 = arith.constant 0 : i32
    %c0_i32_0 = arith.constant 0 : i32
    %c0_i32_1 = arith.constant 0 : i32
    return %c0_i32, %c0_i32_0 : i32, i32
  }
  func.func @transform_2(%arg0: i32) -> (i32, i32) {
    %c0_i32 = arith.constant 0 : i32
    %c0_i32_0 = arith.constant 0 : i32
    %c0_i32_1 = arith.constant 0 : i32
    return %c0_i32, %c0_i32_0 : i32, i32
  }
  func.func @transform_3(%arg0: i32) -> (i32, i32) {
    %c0_i32 = arith.constant 0 : i32
    %c0_i32_0 = arith.constant 0 : i32
    return %arg0, %c0_i32 : i32, i32
  }
}

module attributes {stable_mosaic.version = 11 : i64} {
  func.func @recurrent_kernel(%arg0: i32, %arg1: memref<64x128xf32, #tpu.memory_space<vmem>>, %arg2: memref<8x128xf32, #tpu.memory_space<vmem>>, %arg3: memref<128x128xf32, #tpu.memory_space<vmem>>, %arg4: memref<64x128xf32, #tpu.memory_space<vmem>>, %arg5: memref<8x128xf32, #tpu.memory_space<vmem>>) attributes {dimension_semantics = [#tpu.dimension_semantics<arbitrary>], iteration_bounds = array<i64: 1>, scalar_prefetch = 0 : i64, scratch_operands = 1 : i64, tpu.core_type = #tpu.core_type<tc>, window_params = [{transform_indices = @transform_0, window_bounds = array<i64: 64, 128>}, {pipeline_mode = #tpu.pipeline_mode<synchronous>, transform_indices = @transform_1, window_bounds = array<i64: 8, 128>}, {pipeline_mode = #tpu.pipeline_mode<synchronous>, transform_indices = @transform_2, window_bounds = array<i64: 128, 128>}, {transform_indices = @transform_3, window_bounds = array<i64: 64, 128>}]} {
    %c0_i32 = arith.constant 0 : i32
    %0 = arith.cmpi eq, %arg0, %c0_i32 : i32
    %1 = arith.extui %0 : i1 to i32
    %c0_i32_0 = arith.constant 0 : i32
    %2 = arith.cmpi ne, %1, %c0_i32_0 : i32
    scf.if %2 {
      %c0_52 = arith.constant 0 : index
      %c0_53 = arith.constant 0 : index
      %85 = vector.load %arg2[%c0_52, %c0_53] : memref<8x128xf32, #tpu.memory_space<vmem>>, vector<8x128xf32>
      %c0_54 = arith.constant 0 : index
      %c0_55 = arith.constant 0 : index
      %86 = vector.load %arg5[%c0_54, %c0_55] : memref<8x128xf32, #tpu.memory_space<vmem>>, vector<8x128xf32>
      tpu.vector_store %arg5[%c0_54, %c0_55], %85 {strides = array<i32>} : memref<8x128xf32, #tpu.memory_space<vmem>>, vector<8x128xf32>,
    } else {
    }
    %c0 = arith.constant 0 : index
    %c0_1 = arith.constant 0 : index
    %3 = vector.load %arg5[%c0, %c0_1] : memref<8x128xf32, #tpu.memory_space<vmem>>, vector<8x128xf32>
    %c0_i32_2 = arith.constant 0 : i32
    %c8_i32 = arith.constant 8 : i32
    %4 = arith.muli %c0_i32_2, %c8_i32 : i32
    %5 = tpu.assume_multiple %4, 8 : i32
    %6 = arith.index_cast %5 : i32 to index
    %c0_3 = arith.constant 0 : index
    %7 = vector.load %arg1[%6, %c0_3] : memref<64x128xf32, #tpu.memory_space<vmem>>, vector<8x128xf32>
    %c0_4 = arith.constant 0 : index
    %c0_5 = arith.constant 0 : index
    %8 = vector.load %arg3[%c0_4, %c0_5] : memref<128x128xf32, #tpu.memory_space<vmem>>, vector<128x128xf32>
    %cst = arith.constant dense<0.000000e+00> : vector<8x128xf32>
    %9 = tpu.matmul %3, %8, %cst {dimension_numbers = #tpu.dot_dimension_numbers<[1], [0], [0], [1], [0, 0, 1, 1], [], []>} : vector<8x128xf32>, vector<128x128xf32>, vector<8x128xf32> -> vector<8x128xf32>
    %10 = arith.addf %7, %9 : vector<8x128xf32>
    %11 = math.tanh %10 : vector<8x128xf32>
    %12 = arith.index_cast %5 : i32 to index
    %c0_6 = arith.constant 0 : index
    %13 = vector.load %arg4[%12, %c0_6] : memref<64x128xf32, #tpu.memory_space<vmem>>, vector<8x128xf32>
    tpu.vector_store %arg4[%12, %c0_6], %11 {strides = array<i32>} : memref<64x128xf32, #tpu.memory_space<vmem>>, vector<8x128xf32>,
    %c1_i32 = arith.constant 1 : i32
    %c8_i32_7 = arith.constant 8 : i32
    %14 = arith.muli %c1_i32, %c8_i32_7 : i32
    %15 = tpu.assume_multiple %14, 8 : i32
    %16 = arith.index_cast %15 : i32 to index
    %c0_8 = arith.constant 0 : index
    %17 = vector.load %arg1[%16, %c0_8] : memref<64x128xf32, #tpu.memory_space<vmem>>, vector<8x128xf32>
    %c0_9 = arith.constant 0 : index
    %c0_10 = arith.constant 0 : index
    %18 = vector.load %arg3[%c0_9, %c0_10] : memref<128x128xf32, #tpu.memory_space<vmem>>, vector<128x128xf32>
    %cst_11 = arith.constant dense<0.000000e+00> : vector<8x128xf32>
    %19 = tpu.matmul %11, %18, %cst_11 {dimension_numbers = #tpu.dot_dimension_numbers<[1], [0], [0], [1], [0, 0, 1, 1], [], []>} : vector<8x128xf32>, vector<128x128xf32>, vector<8x128xf32> -> vector<8x128xf32>
    %20 = arith.addf %17, %19 : vector<8x128xf32>
    %21 = math.tanh %20 : vector<8x128xf32>
    %22 = arith.index_cast %15 : i32 to index
    %c0_12 = arith.constant 0 : index
    %23 = vector.load %arg4[%22, %c0_12] : memref<64x128xf32, #tpu.memory_space<vmem>>, vector<8x128xf32>
    tpu.vector_store %arg4[%22, %c0_12], %21 {strides = array<i32>} : memref<64x128xf32, #tpu.memory_space<vmem>>, vector<8x128xf32>,
    %c2_i32 = arith.constant 2 : i32
    %c8_i32_13 = arith.constant 8 : i32
    %24 = arith.muli %c2_i32, %c8_i32_13 : i32
    %25 = tpu.assume_multiple %24, 8 : i32
    %26 = arith.index_cast %25 : i32 to index
    %c0_14 = arith.constant 0 : index
    %27 = vector.load %arg1[%26, %c0_14] : memref<64x128xf32, #tpu.memory_space<vmem>>, vector<8x128xf32>
    %c0_15 = arith.constant 0 : index
    %c0_16 = arith.constant 0 : index
    %28 = vector.load %arg3[%c0_15, %c0_16] : memref<128x128xf32, #tpu.memory_space<vmem>>, vector<128x128xf32>
    %cst_17 = arith.constant dense<0.000000e+00> : vector<8x128xf32>
    %29 = tpu.matmul %21, %28, %cst_17 {dimension_numbers = #tpu.dot_dimension_numbers<[1], [0], [0], [1], [0, 0, 1, 1], [], []>} : vector<8x128xf32>, vector<128x128xf32>, vector<8x128xf32> -> vector<8x128xf32>
    %30 = arith.addf %27, %29 : vector<8x128xf32>
    %31 = math.tanh %30 : vector<8x128xf32>
    %32 = arith.index_cast %25 : i32 to index
    %c0_18 = arith.constant 0 : index
    %33 = vector.load %arg4[%32, %c0_18] : memref<64x128xf32, #tpu.memory_space<vmem>>, vector<8x128xf32>
    tpu.vector_store %arg4[%32, %c0_18], %31 {strides = array<i32>} : memref<64x128xf32, #tpu.memory_space<vmem>>, vector<8x128xf32>,
    %c3_i32 = arith.constant 3 : i32
    %c8_i32_19 = arith.constant 8 : i32
    %34 = arith.muli %c3_i32, %c8_i32_19 : i32
    %35 = tpu.assume_multiple %34, 8 : i32
    %36 = arith.index_cast %35 : i32 to index
    %c0_20 = arith.constant 0 : index
    %37 = vector.load %arg1[%36, %c0_20] : memref<64x128xf32, #tpu.memory_space<vmem>>, vector<8x128xf32>
    %c0_21 = arith.constant 0 : index
    %c0_22 = arith.constant 0 : index
    %38 = vector.load %arg3[%c0_21, %c0_22] : memref<128x128xf32, #tpu.memory_space<vmem>>, vector<128x128xf32>
    %cst_23 = arith.constant dense<0.000000e+00> : vector<8x128xf32>
    %39 = tpu.matmul %31, %38, %cst_23 {dimension_numbers = #tpu.dot_dimension_numbers<[1], [0], [0], [1], [0, 0, 1, 1], [], []>} : vector<8x128xf32>, vector<128x128xf32>, vector<8x128xf32> -> vector<8x128xf32>
    %40 = arith.addf %37, %39 : vector<8x128xf32>
    %41 = math.tanh %40 : vector<8x128xf32>
    %42 = arith.index_cast %35 : i32 to index
    %c0_24 = arith.constant 0 : index
    %43 = vector.load %arg4[%42, %c0_24] : memref<64x128xf32, #tpu.memory_space<vmem>>, vector<8x128xf32>
    tpu.vector_store %arg4[%42, %c0_24], %41 {strides = array<i32>} : memref<64x128xf32, #tpu.memory_space<vmem>>, vector<8x128xf32>,
    %c4_i32 = arith.constant 4 : i32
    %c8_i32_25 = arith.constant 8 : i32
    %44 = arith.muli %c4_i32, %c8_i32_25 : i32
    %45 = tpu.assume_multiple %44, 8 : i32
    %46 = arith.index_cast %45 : i32 to index
    %c0_26 = arith.constant 0 : index
    %47 = vector.load %arg1[%46, %c0_26] : memref<64x128xf32, #tpu.memory_space<vmem>>, vector<8x128xf32>
    %c0_27 = arith.constant 0 : index
    %c0_28 = arith.constant 0 : index
    %48 = vector.load %arg3[%c0_27, %c0_28] : memref<128x128xf32, #tpu.memory_space<vmem>>, vector<128x128xf32>
    %cst_29 = arith.constant dense<0.000000e+00> : vector<8x128xf32>
    %49 = tpu.matmul %41, %48, %cst_29 {dimension_numbers = #tpu.dot_dimension_numbers<[1], [0], [0], [1], [0, 0, 1, 1], [], []>} : vector<8x128xf32>, vector<128x128xf32>, vector<8x128xf32> -> vector<8x128xf32>
    %50 = arith.addf %47, %49 : vector<8x128xf32>
    %51 = math.tanh %50 : vector<8x128xf32>
    %52 = arith.index_cast %45 : i32 to index
    %c0_30 = arith.constant 0 : index
    %53 = vector.load %arg4[%52, %c0_30] : memref<64x128xf32, #tpu.memory_space<vmem>>, vector<8x128xf32>
    tpu.vector_store %arg4[%52, %c0_30], %51 {strides = array<i32>} : memref<64x128xf32, #tpu.memory_space<vmem>>, vector<8x128xf32>,
    %c5_i32 = arith.constant 5 : i32
    %c8_i32_31 = arith.constant 8 : i32
    %54 = arith.muli %c5_i32, %c8_i32_31 : i32
    %55 = tpu.assume_multiple %54, 8 : i32
    %56 = arith.index_cast %55 : i32 to index
    %c0_32 = arith.constant 0 : index
    %57 = vector.load %arg1[%56, %c0_32] : memref<64x128xf32, #tpu.memory_space<vmem>>, vector<8x128xf32>
    %c0_33 = arith.constant 0 : index
    %c0_34 = arith.constant 0 : index
    %58 = vector.load %arg3[%c0_33, %c0_34] : memref<128x128xf32, #tpu.memory_space<vmem>>, vector<128x128xf32>
    %cst_35 = arith.constant dense<0.000000e+00> : vector<8x128xf32>
    %59 = tpu.matmul %51, %58, %cst_35 {dimension_numbers = #tpu.dot_dimension_numbers<[1], [0], [0], [1], [0, 0, 1, 1], [], []>} : vector<8x128xf32>, vector<128x128xf32>, vector<8x128xf32> -> vector<8x128xf32>
    %60 = arith.addf %57, %59 : vector<8x128xf32>
    %61 = math.tanh %60 : vector<8x128xf32>
    %62 = arith.index_cast %55 : i32 to index
    %c0_36 = arith.constant 0 : index
    %63 = vector.load %arg4[%62, %c0_36] : memref<64x128xf32, #tpu.memory_space<vmem>>, vector<8x128xf32>
    tpu.vector_store %arg4[%62, %c0_36], %61 {strides = array<i32>} : memref<64x128xf32, #tpu.memory_space<vmem>>, vector<8x128xf32>,
    %c6_i32 = arith.constant 6 : i32
    %c8_i32_37 = arith.constant 8 : i32
    %64 = arith.muli %c6_i32, %c8_i32_37 : i32
    %65 = tpu.assume_multiple %64, 8 : i32
    %66 = arith.index_cast %65 : i32 to index
    %c0_38 = arith.constant 0 : index
    %67 = vector.load %arg1[%66, %c0_38] : memref<64x128xf32, #tpu.memory_space<vmem>>, vector<8x128xf32>
    %c0_39 = arith.constant 0 : index
    %c0_40 = arith.constant 0 : index
    %68 = vector.load %arg3[%c0_39, %c0_40] : memref<128x128xf32, #tpu.memory_space<vmem>>, vector<128x128xf32>
    %cst_41 = arith.constant dense<0.000000e+00> : vector<8x128xf32>
    %69 = tpu.matmul %61, %68, %cst_41 {dimension_numbers = #tpu.dot_dimension_numbers<[1], [0], [0], [1], [0, 0, 1, 1], [], []>} : vector<8x128xf32>, vector<128x128xf32>, vector<8x128xf32> -> vector<8x128xf32>
    %70 = arith.addf %67, %69 : vector<8x128xf32>
    %71 = math.tanh %70 : vector<8x128xf32>
    %72 = arith.index_cast %65 : i32 to index
    %c0_42 = arith.constant 0 : index
    %73 = vector.load %arg4[%72, %c0_42] : memref<64x128xf32, #tpu.memory_space<vmem>>, vector<8x128xf32>
    tpu.vector_store %arg4[%72, %c0_42], %71 {strides = array<i32>} : memref<64x128xf32, #tpu.memory_space<vmem>>, vector<8x128xf32>,
    %c7_i32 = arith.constant 7 : i32
    %c8_i32_43 = arith.constant 8 : i32
    %74 = arith.muli %c7_i32, %c8_i32_43 : i32
    %75 = tpu.assume_multiple %74, 8 : i32
    %76 = arith.index_cast %75 : i32 to index
    %c0_44 = arith.constant 0 : index
    %77 = vector.load %arg1[%76, %c0_44] : memref<64x128xf32, #tpu.memory_space<vmem>>, vector<8x128xf32>
    %c0_45 = arith.constant 0 : index
    %c0_46 = arith.constant 0 : index
    %78 = vector.load %arg3[%c0_45, %c0_46] : memref<128x128xf32, #tpu.memory_space<vmem>>, vector<128x128xf32>
    %cst_47 = arith.constant dense<0.000000e+00> : vector<8x128xf32>
    %79 = tpu.matmul %71, %78, %cst_47 {dimension_numbers = #tpu.dot_dimension_numbers<[1], [0], [0], [1], [0, 0, 1, 1], [], []>} : vector<8x128xf32>, vector<128x128xf32>, vector<8x128xf32> -> vector<8x128xf32>
    %80 = arith.addf %77, %79 : vector<8x128xf32>
    %81 = math.tanh %80 : vector<8x128xf32>
    %82 = arith.index_cast %75 : i32 to index
    %c0_48 = arith.constant 0 : index
    %83 = vector.load %arg4[%82, %c0_48] : memref<64x128xf32, #tpu.memory_space<vmem>>, vector<8x128xf32>
    tpu.vector_store %arg4[%82, %c0_48], %81 {strides = array<i32>} : memref<64x128xf32, #tpu.memory_space<vmem>>, vector<8x128xf32>,
    %c8_i32_49 = arith.constant 8 : i32
    %c0_50 = arith.constant 0 : index
    %c0_51 = arith.constant 0 : index
    %84 = vector.load %arg5[%c0_50, %c0_51] : memref<8x128xf32, #tpu.memory_space<vmem>>, vector<8x128xf32>
    tpu.vector_store %arg5[%c0_50, %c0_51], %81 {strides = array<i32>} : memref<8x128xf32, #tpu.memory_space<vmem>>, vector<8x128xf32>,
    return
  }
  func.func @transform_0(%arg0: i32) -> (i32, i32) {
    %c0_i32 = arith.constant 0 : i32
    %c0_i32_0 = arith.constant 0 : i32
    return %arg0, %c0_i32 : i32, i32
  }
  func.func @transform_1(%arg0: i32) -> (i32, i32) {
    %c0_i32 = arith.constant 0 : i32
    %c0_i32_0 = arith.constant 0 : i32
    %c0_i32_1 = arith.constant 0 : i32
    return %c0_i32, %c0_i32_0 : i32, i32
  }
  func.func @transform_2(%arg0: i32) -> (i32, i32) {
    %c0_i32 = arith.constant 0 : i32
    %c0_i32_0 = arith.constant 0 : i32
    %c0_i32_1 = arith.constant 0 : i32
    return %c0_i32, %c0_i32_0 : i32, i32
  }
  func.func @transform_3(%arg0: i32) -> (i32, i32) {
    %c0_i32 = arith.constant 0 : i32
    %c0_i32_0 = arith.constant 0 : i32
    return %arg0, %c0_i32 : i32, i32
  }
}

module attributes {stable_mosaic.version = 11 : i64} {
  func.func @out_proj_kernel(%arg0: i32, %arg1: memref<64x128xf32, #tpu.memory_space<vmem>>, %arg2: memref<128x128xf32, #tpu.memory_space<vmem>>, %arg3: memref<1x128xf32, #tpu.memory_space<vmem>>, %arg4: memref<64x128xf32, #tpu.memory_space<vmem>>) attributes {dimension_semantics = [#tpu.dimension_semantics<parallel>], iteration_bounds = array<i64: 1>, scalar_prefetch = 0 : i64, scratch_operands = 0 : i64, tpu.core_type = #tpu.core_type<tc>, window_params = [{transform_indices = @transform_0, window_bounds = array<i64: 64, 128>}, {pipeline_mode = #tpu.pipeline_mode<synchronous>, transform_indices = @transform_1, window_bounds = array<i64: 128, 128>}, {pipeline_mode = #tpu.pipeline_mode<synchronous>, transform_indices = @transform_2, window_bounds = array<i64: 1, 128>}, {transform_indices = @transform_3, window_bounds = array<i64: 64, 128>}]} {
    %c0 = arith.constant 0 : index
    %c0_0 = arith.constant 0 : index
    %0 = vector.load %arg1[%c0, %c0_0] : memref<64x128xf32, #tpu.memory_space<vmem>>, vector<64x128xf32>
    %c0_1 = arith.constant 0 : index
    %c0_2 = arith.constant 0 : index
    %1 = vector.load %arg2[%c0_1, %c0_2] : memref<128x128xf32, #tpu.memory_space<vmem>>, vector<128x128xf32>
    %cst = arith.constant dense<0.000000e+00> : vector<64x128xf32>
    %2 = tpu.matmul %0, %1, %cst {dimension_numbers = #tpu.dot_dimension_numbers<[1], [0], [0], [1], [0, 0, 1, 1], [], []>} : vector<64x128xf32>, vector<128x128xf32>, vector<64x128xf32> -> vector<64x128xf32>
    %c0_3 = arith.constant 0 : index
    %c0_4 = arith.constant 0 : index
    %3 = vector.load %arg3[%c0_3, %c0_4] : memref<1x128xf32, #tpu.memory_space<vmem>>, vector<1x128xf32>
    %4 = vector.broadcast %3 : vector<1x128xf32> to vector<64x128xf32>
    %5 = arith.addf %2, %4 : vector<64x128xf32>
    %cst_5 = arith.constant dense<0xFF800000> : vector<64xf32>
    %6 = vector.multi_reduction <maximumf>, %5, %cst_5 [1] : vector<64x128xf32> to vector<64xf32>
    %7 = vector.shape_cast %6 : vector<64xf32> to vector<64x1xf32>
    %8 = vector.broadcast %7 : vector<64x1xf32> to vector<64x128xf32>
    %9 = arith.subf %5, %8 : vector<64x128xf32>
    %10 = math.exp %9 : vector<64x128xf32>
    %cst_6 = arith.constant dense<0.000000e+00> : vector<64xf32>
    %11 = vector.multi_reduction <add>, %10, %cst_6 [1] : vector<64x128xf32> to vector<64xf32>
    %12 = vector.shape_cast %11 : vector<64xf32> to vector<64x1xf32>
    %13 = vector.broadcast %12 : vector<64x1xf32> to vector<64x128xf32>
    %14 = arith.divf %10, %13 : vector<64x128xf32>
    %c0_7 = arith.constant 0 : index
    %c0_8 = arith.constant 0 : index
    %15 = vector.load %arg4[%c0_7, %c0_8] : memref<64x128xf32, #tpu.memory_space<vmem>>, vector<64x128xf32>
    tpu.vector_store %arg4[%c0_7, %c0_8], %14 {strides = array<i32>} : memref<64x128xf32, #tpu.memory_space<vmem>>, vector<64x128xf32>,
    return
  }
  func.func @transform_0(%arg0: i32) -> (i32, i32) {
    %c0_i32 = arith.constant 0 : i32
    %c0_i32_0 = arith.constant 0 : i32
    return %arg0, %c0_i32 : i32, i32
  }
  func.func @transform_1(%arg0: i32) -> (i32, i32) {
    %c0_i32 = arith.constant 0 : i32
    %c0_i32_0 = arith.constant 0 : i32
    %c0_i32_1 = arith.constant 0 : i32
    return %c0_i32, %c0_i32_0 : i32, i32
  }
  func.func @transform_2(%arg0: i32) -> (i32, i32) {
    %c0_i32 = arith.constant 0 : i32
    %c0_i32_0 = arith.constant 0 : i32
    %c0_i32_1 = arith.constant 0 : i32
    return %c0_i32, %c0_i32_0 : i32, i32
  }
  func.func @transform_3(%arg0: i32) -> (i32, i32) {
    %c0_i32 = arith.constant 0 : i32
    %c0_i32_0 = arith.constant 0 : i32
    return %arg0, %c0_i32 : i32, i32
  }
}

</mosaic_0001>

<llo_original>
// kernel: rnn_forward_sequence.3
$region0: #{rnn_forward_sequence.3}
  #allocation0 [shape = 'u32[]', space=smem, size = 0x4, offset = 0x4, fixed_abs, tag = 'smem constant byte address 0x4 - core index']
  #allocation1 [shape = 'u32[72,128]{1,0:T(1,128)}', space=vmem, size = 0x9000, scoped, tag = 'internal scratch']
  %s0 = inlined_call_operand.vmem [shape: f32[64,16], index: 0, kind: input, shape index: {}]
  %s1 = inlined_call_operand.vmem [shape: f32[16,128], index: 1, kind: input, shape index: {}]
  %s2 = inlined_call_operand.vmem [shape: f32[1,128], index: 2, kind: input, shape index: {}]
  %s3 = inlined_call_operand.vmem [shape: f32[64,128], index: 3, kind: output, shape index: {}]
  %s4 = sld [smem:[#allocation0]]
  $region22: #{rnn_forward_sequence.3} parent=0
    _
  %s6 = ssub.s32 1, %s4
  %s7 = scalar_select 0, %s6, %s4
  // Predicated region
  $region2: #{rnn_forward_sequence.3} parent=0 // pred_check
    _
  $region3: #{rnn_forward_sequence.3} parent=0 // pred_check_branch
    %9 = sbr.rel (0) target = $region5
  $region4: #{rnn_forward_sequence.3} parent=0 // pred_region
    _
  $region5: #{rnn_forward_sequence.3} parent=0 // pred_fallthru
    _
  // Predicated region
  $region6: #{rnn_forward_sequence.3} parent=0 // pred_check
    _
  $region7: #{rnn_forward_sequence.3} parent=0 // pred_check_branch
    %11 = sbr.rel (0) target = $region9
  $region8: #{rnn_forward_sequence.3} parent=0 // pred_region
    _
  $region9: #{rnn_forward_sequence.3} parent=0 // pred_fallthru
    _
  // Predicated region
  $region10: #{rnn_forward_sequence.3} parent=0 // pred_check
    _
  $region11: #{rnn_forward_sequence.3} parent=0 // pred_check_branch
    %13 = sbr.rel (0) target = $region13
  $region12: #{rnn_forward_sequence.3} parent=0 // pred_region
    _
  $region13: #{rnn_forward_sequence.3} parent=0 // pred_fallthru
    _
  %v14 = vld [vmem:[%s0] sm:$0xff]
  %v15 = vld [vmem:[%s0 + $0x8] sm:$0xff]
  %v16 = vld [vmem:[%s0 + $0x10] sm:$0xff]
  %v17 = vld [vmem:[%s0 + $0x18] sm:$0xff]
  %v18 = vld [vmem:[%s0 + $0x20] sm:$0xff]
  %v19 = vld [vmem:[%s0 + $0x28] sm:$0xff]
  %v20 = vld [vmem:[%s0 + $0x30] sm:$0xff]
  %v21 = vld [vmem:[%s0 + $0x38] sm:$0xff]
  %v22 = vld [vmem:[%s1] sm:$0xff]
  %v23 = vld [vmem:[%s1 + $0x8] sm:$0xff]
  %v24 = vld [vmem:[%s2] sm:$0x1]
  %v26 = vperm.slane %v24, 0
  %vm28 = vcmask 130048
  %v30 = vsel %vm28, %v14, 0
  %v33 = vsel %vm28, %v15, 0
  %v36 = vsel %vm28, %v16, 0
  %v39 = vsel %vm28, %v17, 0
  %v42 = vsel %vm28, %v18, 0
  %v45 = vsel %vm28, %v19, 0
  %v48 = vsel %vm28, %v20, 0
  %v51 = vsel %vm28, %v21, 0
  %53 = vmatpush.msra.mxu0 0.0
  %54 = vmatpush.msra.mxu0 0.0
  %55 = vmatpush.msra.mxu0 0.0
  %56 = vmatpush.msra.mxu0 0.0
  %57 = vmatpush.msra.mxu0 0.0
  %58 = vmatpush.msra.mxu0 0.0
  %59 = vmatpush.msra.mxu0 0.0
  %60 = vmatpush.msra.mxu0 0.0
  %61 = vmatpush.msra.mxu0 0.0
  %62 = vmatpush.msra.mxu0 0.0
  %63 = vmatpush.msra.mxu0 0.0
  %64 = vmatpush.msra.mxu0 0.0
  %65 = vmatpush.msra.mxu0 0.0
  %66 = vmatpush.msra.mxu0 0.0
  %67 = vmatpush.msra.mxu0 %v23
  %68 = vmatpush.msra.mxu0 %v22
  %69 = vmatmul.f32.gmra.mxu0 %v30
  %v70 = vpop.f32.mrf.mxu0
  %v71 = vadd.f32 %v26, %v70
  %72 = vmatmul.f32.gmra.mxu0 %v33
  %v73 = vpop.f32.mrf.mxu0
  %v74 = vadd.f32 %v26, %v73
  %75 = vmatmul.f32.gmra.mxu0 %v36
  %v76 = vpop.f32.mrf.mxu0
  %v77 = vadd.f32 %v26, %v76
  %78 = vmatmul.f32.gmra.mxu0 %v39
  %v79 = vpop.f32.mrf.mxu0
  %v80 = vadd.f32 %v26, %v79
  %81 = vmatmul.f32.gmra.mxu0 %v42
  %v82 = vpop.f32.mrf.mxu0
  %v83 = vadd.f32 %v26, %v82
  %84 = vmatmul.f32.gmra.mxu0 %v45
  %v85 = vpop.f32.mrf.mxu0
  %v86 = vadd.f32 %v26, %v85
  %87 = vmatmul.f32.gmra.mxu0 %v48
  %v88 = vpop.f32.mrf.mxu0
  %v89 = vadd.f32 %v26, %v88
  %90 = vmatmul.f32.gmra.mxu0 %v51
  %v91 = vpop.f32.mrf.mxu0
  %v92 = vadd.f32 %v26, %v91
  %93 = vdwg.mxu0
  %94 = vst [vmem:[%s3] sm:$0xff] %v71
  %95 = vst [vmem:[%s3 + $0x8] sm:$0xff] %v74
  %96 = vst [vmem:[%s3 + $0x10] sm:$0xff] %v77
  %97 = vst [vmem:[%s3 + $0x18] sm:$0xff] %v80
  %98 = vst [vmem:[%s3 + $0x20] sm:$0xff] %v83
  %99 = vst [vmem:[%s3 + $0x28] sm:$0xff] %v86
  %100 = vst [vmem:[%s3 + $0x30] sm:$0xff] %v89
  %101 = vst [vmem:[%s3 + $0x38] sm:$0xff] %v92
  // Predicated region
  $region14: #{rnn_forward_sequence.3} parent=0 // pred_check
    _
  $region15: #{rnn_forward_sequence.3} parent=0 // pred_check_branch
    %103 = sbr.rel (0) target = $region17
  $region16: #{rnn_forward_sequence.3} parent=0 // pred_region
    _
  $region17: #{rnn_forward_sequence.3} parent=0 // pred_fallthru
    _
  // Predicated region
  $region18: #{rnn_forward_sequence.3} parent=0 // pred_check
    _
  $region19: #{rnn_forward_sequence.3} parent=0 // pred_check_branch
    %105 = sbr.rel (0) target = $region21
  $region20: #{rnn_forward_sequence.3} parent=0 // pred_region
    _
  $region21: #{rnn_forward_sequence.3} parent=0 // pred_fallthru
    _

// kernel: rnn_forward_sequence.5
$region0: #{rnn_forward_sequence.5}
  #allocation0 [shape = 'u32[]', space=smem, size = 0x4, offset = 0x4, fixed_abs, tag = 'smem constant byte address 0x4 - core index']
  #allocation1 [shape = 'u32[72,128]{1,0:T(1,128)}', space=vmem, size = 0x9000, scoped, tag = 'internal scratch']
  %s0 = inlined_call_operand.vmem [shape: f32[64,128], index: 0, kind: input, shape index: {}]
  %s1 = inlined_call_operand.vmem [shape: f32[128,128], index: 1, kind: input, shape index: {}]
  %s2 = inlined_call_operand.vmem [shape: f32[1,128], index: 2, kind: input, shape index: {}]
  %s3 = inlined_call_operand.vmem [shape: f32[64,128], index: 3, kind: output, shape index: {}]
  %s4 = sld [smem:[#allocation0]]
  $region22: #{rnn_forward_sequence.5} parent=0
    _
  %s6 = ssub.s32 1, %s4
  %s7 = scalar_select 0, %s6, %s4
  // Predicated region
  $region2: #{rnn_forward_sequence.5} parent=0 // pred_check
    _
  $region3: #{rnn_forward_sequence.5} parent=0 // pred_check_branch
    %9 = sbr.rel (0) target = $region5
  $region4: #{rnn_forward_sequence.5} parent=0 // pred_region
    _
  $region5: #{rnn_forward_sequence.5} parent=0 // pred_fallthru
    _
  // Predicated region
  $region6: #{rnn_forward_sequence.5} parent=0 // pred_check
    _
  $region7: #{rnn_forward_sequence.5} parent=0 // pred_check_branch
    %11 = sbr.rel (0) target = $region9
  $region8: #{rnn_forward_sequence.5} parent=0 // pred_region
    _
  $region9: #{rnn_forward_sequence.5} parent=0 // pred_fallthru
    _
  // Predicated region
  $region10: #{rnn_forward_sequence.5} parent=0 // pred_check
    _
  $region11: #{rnn_forward_sequence.5} parent=0 // pred_check_branch
    %13 = sbr.rel (0) target = $region13
  $region12: #{rnn_forward_sequence.5} parent=0 // pred_region
    _
  $region13: #{rnn_forward_sequence.5} parent=0 // pred_fallthru
    _
  %v14 = vld [vmem:[%s0] sm:$0xff]
  %v15 = vld [vmem:[%s0 + $0x8] sm:$0xff]
  %v16 = vld [vmem:[%s0 + $0x10] sm:$0xff]
  %v17 = vld [vmem:[%s0 + $0x18] sm:$0xff]
  %v18 = vld [vmem:[%s0 + $0x20] sm:$0xff]
  %v19 = vld [vmem:[%s0 + $0x28] sm:$0xff]
  %v20 = vld [vmem:[%s0 + $0x30] sm:$0xff]
  %v21 = vld [vmem:[%s0 + $0x38] sm:$0xff]
  %v22 = vld [vmem:[%s1] sm:$0xff]
  %v23 = vld [vmem:[%s1 + $0x8] sm:$0xff]
  %v24 = vld [vmem:[%s1 + $0x10] sm:$0xff]
  %v25 = vld [vmem:[%s1 + $0x18] sm:$0xff]
  %v26 = vld [vmem:[%s1 + $0x20] sm:$0xff]
  %v27 = vld [vmem:[%s1 + $0x28] sm:$0xff]
  %v28 = vld [vmem:[%s1 + $0x30] sm:$0xff]
  %v29 = vld [vmem:[%s1 + $0x38] sm:$0xff]
  %v30 = vld [vmem:[%s1 + $0x40] sm:$0xff]
  %v31 = vld [vmem:[%s1 + $0x48] sm:$0xff]
  %v32 = vld [vmem:[%s1 + $0x50] sm:$0xff]
  %v33 = vld [vmem:[%s1 + $0x58] sm:$0xff]
  %v34 = vld [vmem:[%s1 + $0x60] sm:$0xff]
  %v35 = vld [vmem:[%s1 + $0x68] sm:$0xff]
  %v36 = vld [vmem:[%s1 + $0x70] sm:$0xff]
  %v37 = vld [vmem:[%s1 + $0x78] sm:$0xff]
  %v38 = vld [vmem:[%s2] sm:$0x1]
  %v40 = vperm.slane %v38, 0
  %42 = vmatpush.msra.mxu0 %v37
  %43 = vmatpush.msra.mxu0 %v36
  %44 = vmatpush.msra.mxu0 %v35
  %45 = vmatpush.msra.mxu0 %v34
  %46 = vmatpush.msra.mxu0 %v33
  %47 = vmatpush.msra.mxu0 %v32
  %48 = vmatpush.msra.mxu0 %v31
  %49 = vmatpush.msra.mxu0 %v30
  %50 = vmatpush.msra.mxu0 %v29
  %51 = vmatpush.msra.mxu0 %v28
  %52 = vmatpush.msra.mxu0 %v27
  %53 = vmatpush.msra.mxu0 %v26
  %54 = vmatpush.msra.mxu0 %v25
  %55 = vmatpush.msra.mxu0 %v24
  %56 = vmatpush.msra.mxu0 %v23
  %57 = vmatpush.msra.mxu0 %v22
  %58 = vmatmul.f32.gmra.mxu0 %v14
  %v59 = vpop.f32.mrf.mxu0
  %v60 = vadd.f32 %v40, %v59
  %61 = vmatmul.f32.gmra.mxu0 %v15
  %v62 = vpop.f32.mrf.mxu0
  %v63 = vadd.f32 %v40, %v62
  %64 = vmatmul.f32.gmra.mxu0 %v16
  %v65 = vpop.f32.mrf.mxu0
  %v66 = vadd.f32 %v40, %v65
  %67 = vmatmul.f32.gmra.mxu0 %v17
  %v68 = vpop.f32.mrf.mxu0
  %v69 = vadd.f32 %v40, %v68
  %70 = vmatmul.f32.gmra.mxu0 %v18
  %v71 = vpop.f32.mrf.mxu0
  %v72 = vadd.f32 %v40, %v71
  %73 = vmatmul.f32.gmra.mxu0 %v19
  %v74 = vpop.f32.mrf.mxu0
  %v75 = vadd.f32 %v40, %v74
  %76 = vmatmul.f32.gmra.mxu0 %v20
  %v77 = vpop.f32.mrf.mxu0
  %v78 = vadd.f32 %v40, %v77
  %79 = vmatmul.f32.gmra.mxu0 %v21
  %v80 = vpop.f32.mrf.mxu0
  %v81 = vadd.f32 %v40, %v80
  %82 = vdwg.mxu0
  %83 = vmax.xlane.f32.xlu0 %v60
  %v84 = vpop.xlane.xlu0 %83
  %85 = vmax.xlane.f32.xlu0 %v63
  %v86 = vpop.xlane.xlu0 %85
  %87 = vmax.xlane.f32.xlu0 %v66
  %v88 = vpop.xlane.xlu0 %87
  %89 = vmax.xlane.f32.xlu0 %v69
  %v90 = vpop.xlane.xlu0 %89
  %91 = vmax.xlane.f32.xlu0 %v72
  %v92 = vpop.xlane.xlu0 %91
  %93 = vmax.xlane.f32.xlu0 %v75
  %v94 = vpop.xlane.xlu0 %93
  %95 = vmax.xlane.f32.xlu0 %v78
  %v96 = vpop.xlane.xlu0 %95
  %97 = vmax.xlane.f32.xlu0 %v81
  %v98 = vpop.xlane.xlu0 %97
  %v99 = vsub.f32 %v60, %v84
  %v100 = vsub.f32 %v63, %v86
  %v101 = vsub.f32 %v66, %v88
  %v102 = vsub.f32 %v69, %v90
  %v103 = vsub.f32 %v72, %v92
  %v104 = vsub.f32 %v75, %v94
  %v105 = vsub.f32 %v78, %v96
  %v106 = vsub.f32 %v81, %v98
  %v107 = vmul.f32 %v99, 1.442695
  %v108 = vpow.pop %v107
  %v109 = vmul.f32 %v100, 1.442695
  %v110 = vpow.pop %v109
  %v111 = vmul.f32 %v101, 1.442695
  %v112 = vpow.pop %v111
  %v113 = vmul.f32 %v102, 1.442695
  %v114 = vpow.pop %v113
  %v115 = vmul.f32 %v103, 1.442695
  %v116 = vpow.pop %v115
  %v117 = vmul.f32 %v104, 1.442695
  %v118 = vpow.pop %v117
  %v119 = vmul.f32 %v105, 1.442695
  %v120 = vpow.pop %v119
  %v121 = vmul.f32 %v106, 1.442695
  %v122 = vpow.pop %v121
  %123 = vadd.xlane.f32.xlu0 %v108
  %v124 = vpop.xlane.xlu0 %123
  %125 = vadd.xlane.f32.xlu0 %v110
  %v126 = vpop.xlane.xlu0 %125
  %127 = vadd.xlane.f32.xlu0 %v112
  %v128 = vpop.xlane.xlu0 %127
  %129 = vadd.xlane.f32.xlu0 %v114
  %v130 = vpop.xlane.xlu0 %129
  %131 = vadd.xlane.f32.xlu0 %v116
  %v132 = vpop.xlane.xlu0 %131
  %133 = vadd.xlane.f32.xlu0 %v118
  %v134 = vpop.xlane.xlu0 %133
  %135 = vadd.xlane.f32.xlu0 %v120
  %v136 = vpop.xlane.xlu0 %135
  %137 = vadd.xlane.f32.xlu0 %v122
  %v138 = vpop.xlane.xlu0 %137
  %v139 = vrcp.pop %v124
  %v140 = vmul.f32 %v124, %v139
  %v141 = vsub.f32 1.0, %v140
  %v142 = vmul.f32 %v139, %v141
  %v143 = vadd.f32 %v139, %v142
  %vm144 = vweird.f32 %v124
  %vm145 = vweird.f32 %v139
  %vm146 = vmor %vm144, %vm145
  %v147 = vsel %vm146, %v139, %v143
  %v148 = vand.u32 2147483647, %v124
  %vm149 = vcmp.eq.f32.partialorder %v148, 8.507059e+37
  %v150 = vand.u32 %v124, 2147483648
  %v151 = vor.u32 1.1754944e-38, %v150
  %v152 = vsel %vm149, %v151, %v147
  %v153 = vmul.f32 %v108, %v152
  %v154 = vrcp.pop %v126
  %v155 = vmul.f32 %v126, %v154
  %v156 = vsub.f32 1.0, %v155
  %v157 = vmul.f32 %v154, %v156
  %v158 = vadd.f32 %v154, %v157
  %vm159 = vweird.f32 %v126
  %vm160 = vweird.f32 %v154
  %vm161 = vmor %vm159, %vm160
  %v162 = vsel %vm161, %v154, %v158
  %v163 = vand.u32 2147483647, %v126
  %vm164 = vcmp.eq.f32.partialorder %v163, 8.507059e+37
  %v165 = vand.u32 %v126, 2147483648
  %v166 = vor.u32 1.1754944e-38, %v165
  %v167 = vsel %vm164, %v166, %v162
  %v168 = vmul.f32 %v110, %v167
  %v169 = vrcp.pop %v128
  %v170 = vmul.f32 %v128, %v169
  %v171 = vsub.f32 1.0, %v170
  %v172 = vmul.f32 %v169, %v171
  %v173 = vadd.f32 %v169, %v172
  %vm174 = vweird.f32 %v128
  %vm175 = vweird.f32 %v169
  %vm176 = vmor %vm174, %vm175
  %v177 = vsel %vm176, %v169, %v173
  %v178 = vand.u32 2147483647, %v128
  %vm179 = vcmp.eq.f32.partialorder %v178, 8.507059e+37
  %v180 = vand.u32 %v128, 2147483648
  %v181 = vor.u32 1.1754944e-38, %v180
  %v182 = vsel %vm179, %v181, %v177
  %v183 = vmul.f32 %v112, %v182
  %v184 = vrcp.pop %v130
  %v185 = vmul.f32 %v130, %v184
  %v186 = vsub.f32 1.0, %v185
  %v187 = vmul.f32 %v184, %v186
  %v188 = vadd.f32 %v184, %v187
  %vm189 = vweird.f32 %v130
  %vm190 = vweird.f32 %v184
  %vm191 = vmor %vm189, %vm190
  %v192 = vsel %vm191, %v184, %v188
  %v193 = vand.u32 2147483647, %v130
  %vm194 = vcmp.eq.f32.partialorder %v193, 8.507059e+37
  %v195 = vand.u32 %v130, 2147483648
  %v196 = vor.u32 1.1754944e-38, %v195
  %v197 = vsel %vm194, %v196, %v192
  %v198 = vmul.f32 %v114, %v197
  %v199 = vrcp.pop %v132
  %v200 = vmul.f32 %v132, %v199
  %v201 = vsub.f32 1.0, %v200
  %v202 = vmul.f32 %v199, %v201
  %v203 = vadd.f32 %v199, %v202
  %vm204 = vweird.f32 %v132
  %vm205 = vweird.f32 %v199
  %vm206 = vmor %vm204, %vm205
  %v207 = vsel %vm206, %v199, %v203
  %v208 = vand.u32 2147483647, %v132
  %vm209 = vcmp.eq.f32.partialorder %v208, 8.507059e+37
  %v210 = vand.u32 %v132, 2147483648
  %v211 = vor.u32 1.1754944e-38, %v210
  %v212 = vsel %vm209, %v211, %v207
  %v213 = vmul.f32 %v116, %v212
  %v214 = vrcp.pop %v134
  %v215 = vmul.f32 %v134, %v214
  %v216 = vsub.f32 1.0, %v215
  %v217 = vmul.f32 %v214, %v216
  %v218 = vadd.f32 %v214, %v217
  %vm219 = vweird.f32 %v134
  %vm220 = vweird.f32 %v214
  %vm221 = vmor %vm219, %vm220
  %v222 = vsel %vm221, %v214, %v218
  %v223 = vand.u32 2147483647, %v134
  %vm224 = vcmp.eq.f32.partialorder %v223, 8.507059e+37
  %v225 = vand.u32 %v134, 2147483648
  %v226 = vor.u32 1.1754944e-38, %v225
  %v227 = vsel %vm224, %v226, %v222
  %v228 = vmul.f32 %v118, %v227
  %v229 = vrcp.pop %v136
  %v230 = vmul.f32 %v136, %v229
  %v231 = vsub.f32 1.0, %v230
  %v232 = vmul.f32 %v229, %v231
  %v233 = vadd.f32 %v229, %v232
  %vm234 = vweird.f32 %v136
  %vm235 = vweird.f32 %v229
  %vm236 = vmor %vm234, %vm235
  %v237 = vsel %vm236, %v229, %v233
  %v238 = vand.u32 2147483647, %v136
  %vm239 = vcmp.eq.f32.partialorder %v238, 8.507059e+37
  %v240 = vand.u32 %v136, 2147483648
  %v241 = vor.u32 1.1754944e-38, %v240
  %v242 = vsel %vm239, %v241, %v237
  %v243 = vmul.f32 %v120, %v242
  %v244 = vrcp.pop %v138
  %v245 = vmul.f32 %v138, %v244
  %v246 = vsub.f32 1.0, %v245
  %v247 = vmul.f32 %v244, %v246
  %v248 = vadd.f32 %v244, %v247
  %vm249 = vweird.f32 %v138
  %vm250 = vweird.f32 %v244
  %vm251 = vmor %vm249, %vm250
  %v252 = vsel %vm251, %v244, %v248
  %v253 = vand.u32 2147483647, %v138
  %vm254 = vcmp.eq.f32.partialorder %v253, 8.507059e+37
  %v255 = vand.u32 %v138, 2147483648
  %v256 = vor.u32 1.1754944e-38, %v255
  %v257 = vsel %vm254, %v256, %v252
  %v258 = vmul.f32 %v122, %v257
  %259 = vst [vmem:[%s3] sm:$0xff] %v153
  %260 = vst [vmem:[%s3 + $0x8] sm:$0xff] %v168
  %261 = vst [vmem:[%s3 + $0x10] sm:$0xff] %v183
  %262 = vst [vmem:[%s3 + $0x18] sm:$0xff] %v198
  %263 = vst [vmem:[%s3 + $0x20] sm:$0xff] %v213
  %264 = vst [vmem:[%s3 + $0x28] sm:$0xff] %v228
  %265 = vst [vmem:[%s3 + $0x30] sm:$0xff] %v243
  %266 = vst [vmem:[%s3 + $0x38] sm:$0xff] %v258
  // Predicated region
  $region14: #{rnn_forward_sequence.5} parent=0 // pred_check
    _
  $region15: #{rnn_forward_sequence.5} parent=0 // pred_check_branch
    %268 = sbr.rel (0) target = $region17
  $region16: #{rnn_forward_sequence.5} parent=0 // pred_region
    _
  $region17: #{rnn_forward_sequence.5} parent=0 // pred_fallthru
    _
  // Predicated region
  $region18: #{rnn_forward_sequence.5} parent=0 // pred_check
    _
  $region19: #{rnn_forward_sequence.5} parent=0 // pred_check_branch
    %270 = sbr.rel (0) target = $region21
  $region20: #{rnn_forward_sequence.5} parent=0 // pred_region
    _
  $region21: #{rnn_forward_sequence.5} parent=0 // pred_fallthru
    _

// kernel: rnn_forward_sequence.4
$region0: #{rnn_forward_sequence.4}
  #allocation0 [shape = 'u32[]', space=smem, size = 0x4, offset = 0x4, fixed_abs, tag = 'smem constant byte address 0x4 - core index']
  #allocation1 [shape = 'u32[72,128]{1,0:T(1,128)}', space=vmem, size = 0x9000, scoped, tag = 'internal scratch']
  #allocation2 [shape = 'f32[8,128]{1,0:T(8,128)}', space=vmem, size = 0x1000, scoped, tag = 'scratch operand']
  %s0 = inlined_call_operand.vmem [shape: f32[64,128], index: 0, kind: input, shape index: {}]
  %s1 = inlined_call_operand.vmem [shape: f32[8,128], index: 1, kind: input, shape index: {}]
  %s2 = inlined_call_operand.vmem [shape: f32[128,128], index: 2, kind: input, shape index: {}]
  %s3 = inlined_call_operand.vmem [shape: f32[64,128], index: 3, kind: output, shape index: {}]
  %s4 = sld [smem:[#allocation0]]
  $region26: #{rnn_forward_sequence.4} parent=0
    _
  %s6 = ssub.s32 1, %s4
  %s7 = scalar_select 0, %s6, %s4
  // Predicated region
  $region2: #{rnn_forward_sequence.4} parent=0 // pred_check
    _
  $region3: #{rnn_forward_sequence.4} parent=0 // pred_check_branch
    %9 = sbr.rel (0) target = $region5
  $region4: #{rnn_forward_sequence.4} parent=0 // pred_region
    _
  $region5: #{rnn_forward_sequence.4} parent=0 // pred_fallthru
    _
  // Predicated region
  $region6: #{rnn_forward_sequence.4} parent=0 // pred_check
    _
  $region7: #{rnn_forward_sequence.4} parent=0 // pred_check_branch
    %11 = sbr.rel (0) target = $region9
  $region8: #{rnn_forward_sequence.4} parent=0 // pred_region
    _
  $region9: #{rnn_forward_sequence.4} parent=0 // pred_fallthru
    _
  // Predicated region
  $region10: #{rnn_forward_sequence.4} parent=0 // pred_check
    _
  $region11: #{rnn_forward_sequence.4} parent=0 // pred_check_branch
    %13 = sbr.rel (0) target = $region13
  $region12: #{rnn_forward_sequence.4} parent=0 // pred_region
    _
  $region13: #{rnn_forward_sequence.4} parent=0 // pred_fallthru
    _
  %p14 = scmp.eq.s32.totalorder 0, 0
  // Predicated region
  $region14: #{rnn_forward_sequence.4} parent=0 // pred_check
    %p15 = pneg %p14
  $region15: #{rnn_forward_sequence.4} parent=0 // pred_check_branch
    %17 = sbr.rel (%p15) target = $region17
  $region16: #{rnn_forward_sequence.4} parent=0 // pred_region
    %v18 = vld [vmem:[%s1] sm:$0xff]
    %19 = vst [vmem:[#allocation2] sm:$0xff] %v18
  $region17: #{rnn_forward_sequence.4} parent=0 // pred_fallthru
    _
  %v20 = vld [vmem:[#allocation2] sm:$0xff]
  %v21 = vld [vmem:[%s0] sm:$0xff]
  %v22 = vld [vmem:[%s2] sm:$0xff]
  %v23 = vld [vmem:[%s2 + $0x8] sm:$0xff]
  %v24 = vld [vmem:[%s2 + $0x10] sm:$0xff]
  %v25 = vld [vmem:[%s2 + $0x18] sm:$0xff]
  %v26 = vld [vmem:[%s2 + $0x20] sm:$0xff]
  %v27 = vld [vmem:[%s2 + $0x28] sm:$0xff]
  %v28 = vld [vmem:[%s2 + $0x30] sm:$0xff]
  %v29 = vld [vmem:[%s2 + $0x38] sm:$0xff]
  %v30 = vld [vmem:[%s2 + $0x40] sm:$0xff]
  %v31 = vld [vmem:[%s2 + $0x48] sm:$0xff]
  %v32 = vld [vmem:[%s2 + $0x50] sm:$0xff]
  %v33 = vld [vmem:[%s2 + $0x58] sm:$0xff]
  %v34 = vld [vmem:[%s2 + $0x60] sm:$0xff]
  %v35 = vld [vmem:[%s2 + $0x68] sm:$0xff]
  %v36 = vld [vmem:[%s2 + $0x70] sm:$0xff]
  %v37 = vld [vmem:[%s2 + $0x78] sm:$0xff]
  %38 = vmatpush.msra.mxu0 %v37
  %39 = vmatpush.msra.mxu0 %v36
  %40 = vmatpush.msra.mxu0 %v35
  %41 = vmatpush.msra.mxu0 %v34
  %42 = vmatpush.msra.mxu0 %v33
  %43 = vmatpush.msra.mxu0 %v32
  %44 = vmatpush.msra.mxu0 %v31
  %45 = vmatpush.msra.mxu0 %v30
  %46 = vmatpush.msra.mxu0 %v29
  %47 = vmatpush.msra.mxu0 %v28
  %48 = vmatpush.msra.mxu0 %v27
  %49 = vmatpush.msra.mxu0 %v26
  %50 = vmatpush.msra.mxu0 %v25
  %51 = vmatpush.msra.mxu0 %v24
  %52 = vmatpush.msra.mxu0 %v23
  %53 = vmatpush.msra.mxu0 %v22
  %54 = vmatmul.f32.gmra.mxu0 %v20
  %v55 = vpop.f32.mrf.mxu0
  %v56 = vadd.f32 0.0, %v55
  %57 = vdwg.mxu0
  %v58 = vadd.f32 %v21, %v56
  %v59 = vtanh.pop %v58
  %60 = vst [vmem:[%s3] sm:$0xff] %v59
  %s61 = scalar_lea.vmem %s0, 8
  %v62 = vld [vmem:[%s61] sm:$0xff]
  %v63 = vld [vmem:[%s2] sm:$0xff]
  %v64 = vld [vmem:[%s2 + $0x8] sm:$0xff]
  %v65 = vld [vmem:[%s2 + $0x10] sm:$0xff]
  %v66 = vld [vmem:[%s2 + $0x18] sm:$0xff]
  %v67 = vld [vmem:[%s2 + $0x20] sm:$0xff]
  %v68 = vld [vmem:[%s2 + $0x28] sm:$0xff]
  %v69 = vld [vmem:[%s2 + $0x30] sm:$0xff]
  %v70 = vld [vmem:[%s2 + $0x38] sm:$0xff]
  %v71 = vld [vmem:[%s2 + $0x40] sm:$0xff]
  %v72 = vld [vmem:[%s2 + $0x48] sm:$0xff]
  %v73 = vld [vmem:[%s2 + $0x50] sm:$0xff]
  %v74 = vld [vmem:[%s2 + $0x58] sm:$0xff]
  %v75 = vld [vmem:[%s2 + $0x60] sm:$0xff]
  %v76 = vld [vmem:[%s2 + $0x68] sm:$0xff]
  %v77 = vld [vmem:[%s2 + $0x70] sm:$0xff]
  %v78 = vld [vmem:[%s2 + $0x78] sm:$0xff]
  %79 = vmatpush.msra.mxu0 %v78
  %80 = vmatpush.msra.mxu0 %v77
  %81 = vmatpush.msra.mxu0 %v76
  %82 = vmatpush.msra.mxu0 %v75
  %83 = vmatpush.msra.mxu0 %v74
  %84 = vmatpush.msra.mxu0 %v73
  %85 = vmatpush.msra.mxu0 %v72
  %86 = vmatpush.msra.mxu0 %v71
  %87 = vmatpush.msra.mxu0 %v70
  %88 = vmatpush.msra.mxu0 %v69
  %89 = vmatpush.msra.mxu0 %v68
  %90 = vmatpush.msra.mxu0 %v67
  %91 = vmatpush.msra.mxu0 %v66
  %92 = vmatpush.msra.mxu0 %v65
  %93 = vmatpush.msra.mxu0 %v64
  %94 = vmatpush.msra.mxu0 %v63
  %95 = vmatmul.f32.gmra.mxu0 %v59
  %v96 = vpop.f32.mrf.mxu0
  %v97 = vadd.f32 0.0, %v96
  %98 = vdwg.mxu0
  %v99 = vadd.f32 %v62, %v97
  %v100 = vtanh.pop %v99
  %s101 = scalar_lea.vmem %s3, 8
  %102 = vst [vmem:[%s101] sm:$0xff] %v100
  %s103 = scalar_lea.vmem %s0, 16
  %v104 = vld [vmem:[%s103] sm:$0xff]
  %v105 = vld [vmem:[%s2] sm:$0xff]
  %v106 = vld [vmem:[%s2 + $0x8] sm:$0xff]
  %v107 = vld [vmem:[%s2 + $0x10] sm:$0xff]
  %v108 = vld [vmem:[%s2 + $0x18] sm:$0xff]
  %v109 = vld [vmem:[%s2 + $0x20] sm:$0xff]
  %v110 = vld [vmem:[%s2 + $0x28] sm:$0xff]
  %v111 = vld [vmem:[%s2 + $0x30] sm:$0xff]
  %v112 = vld [vmem:[%s2 + $0x38] sm:$0xff]
  %v113 = vld [vmem:[%s2 + $0x40] sm:$0xff]
  %v114 = vld [vmem:[%s2 + $0x48] sm:$0xff]
  %v115 = vld [vmem:[%s2 + $0x50] sm:$0xff]
  %v116 = vld [vmem:[%s2 + $0x58] sm:$0xff]
  %v117 = vld [vmem:[%s2 + $0x60] sm:$0xff]
  %v118 = vld [vmem:[%s2 + $0x68] sm:$0xff]
  %v119 = vld [vmem:[%s2 + $0x70] sm:$0xff]
  %v120 = vld [vmem:[%s2 + $0x78] sm:$0xff]
  %121 = vmatpush.msra.mxu0 %v120
  %122 = vmatpush.msra.mxu0 %v119
  %123 = vmatpush.msra.mxu0 %v118
  %124 = vmatpush.msra.mxu0 %v117
  %125 = vmatpush.msra.mxu0 %v116
  %126 = vmatpush.msra.mxu0 %v115
  %127 = vmatpush.msra.mxu0 %v114
  %128 = vmatpush.msra.mxu0 %v113
  %129 = vmatpush.msra.mxu0 %v112
  %130 = vmatpush.msra.mxu0 %v111
  %131 = vmatpush.msra.mxu0 %v110
  %132 = vmatpush.msra.mxu0 %v109
  %133 = vmatpush.msra.mxu0 %v108
  %134 = vmatpush.msra.mxu0 %v107
  %135 = vmatpush.msra.mxu0 %v106
  %136 = vmatpush.msra.mxu0 %v105
  %137 = vmatmul.f32.gmra.mxu0 %v100
  %v138 = vpop.f32.mrf.mxu0
  %v139 = vadd.f32 0.0, %v138
  %140 = vdwg.mxu0
  %v141 = vadd.f32 %v104, %v139
  %v142 = vtanh.pop %v141
  %s143 = scalar_lea.vmem %s3, 16
  %144 = vst [vmem:[%s143] sm:$0xff] %v142
  %s145 = scalar_lea.vmem %s0, 24
  %v146 = vld [vmem:[%s145] sm:$0xff]
  %v147 = vld [vmem:[%s2] sm:$0xff]
  %v148 = vld [vmem:[%s2 + $0x8] sm:$0xff]
  %v149 = vld [vmem:[%s2 + $0x10] sm:$0xff]
  %v150 = vld [vmem:[%s2 + $0x18] sm:$0xff]
  %v151 = vld [vmem:[%s2 + $0x20] sm:$0xff]
  %v152 = vld [vmem:[%s2 + $0x28] sm:$0xff]
  %v153 = vld [vmem:[%s2 + $0x30] sm:$0xff]
  %v154 = vld [vmem:[%s2 + $0x38] sm:$0xff]
  %v155 = vld [vmem:[%s2 + $0x40] sm:$0xff]
  %v156 = vld [vmem:[%s2 + $0x48] sm:$0xff]
  %v157 = vld [vmem:[%s2 + $0x50] sm:$0xff]
  %v158 = vld [vmem:[%s2 + $0x58] sm:$0xff]
  %v159 = vld [vmem:[%s2 + $0x60] sm:$0xff]
  %v160 = vld [vmem:[%s2 + $0x68] sm:$0xff]
  %v161 = vld [vmem:[%s2 + $0x70] sm:$0xff]
  %v162 = vld [vmem:[%s2 + $0x78] sm:$0xff]
  %163 = vmatpush.msra.mxu0 %v162
  %164 = vmatpush.msra.mxu0 %v161
  %165 = vmatpush.msra.mxu0 %v160
  %166 = vmatpush.msra.mxu0 %v159
  %167 = vmatpush.msra.mxu0 %v158
  %168 = vmatpush.msra.mxu0 %v157
  %169 = vmatpush.msra.mxu0 %v156
  %170 = vmatpush.msra.mxu0 %v155
  %171 = vmatpush.msra.mxu0 %v154
  %172 = vmatpush.msra.mxu0 %v153
  %173 = vmatpush.msra.mxu0 %v152
  %174 = vmatpush.msra.mxu0 %v151
  %175 = vmatpush.msra.mxu0 %v150
  %176 = vmatpush.msra.mxu0 %v149
  %177 = vmatpush.msra.mxu0 %v148
  %178 = vmatpush.msra.mxu0 %v147
  %179 = vmatmul.f32.gmra.mxu0 %v142
  %v180 = vpop.f32.mrf.mxu0
  %v181 = vadd.f32 0.0, %v180
  %182 = vdwg.mxu0
  %v183 = vadd.f32 %v146, %v181
  %v184 = vtanh.pop %v183
  %s185 = scalar_lea.vmem %s3, 24
  %186 = vst [vmem:[%s185] sm:$0xff] %v184
  %s187 = scalar_lea.vmem %s0, 32
  %v188 = vld [vmem:[%s187] sm:$0xff]
  %v189 = vld [vmem:[%s2] sm:$0xff]
  %v190 = vld [vmem:[%s2 + $0x8] sm:$0xff]
  %v191 = vld [vmem:[%s2 + $0x10] sm:$0xff]
  %v192 = vld [vmem:[%s2 + $0x18] sm:$0xff]
  %v193 = vld [vmem:[%s2 + $0x20] sm:$0xff]
  %v194 = vld [vmem:[%s2 + $0x28] sm:$0xff]
  %v195 = vld [vmem:[%s2 + $0x30] sm:$0xff]
  %v196 = vld [vmem:[%s2 + $0x38] sm:$0xff]
  %v197 = vld [vmem:[%s2 + $0x40] sm:$0xff]
  %v198 = vld [vmem:[%s2 + $0x48] sm:$0xff]
  %v199 = vld [vmem:[%s2 + $0x50] sm:$0xff]
  %v200 = vld [vmem:[%s2 + $0x58] sm:$0xff]
  %v201 = vld [vmem:[%s2 + $0x60] sm:$0xff]
  %v202 = vld [vmem:[%s2 + $0x68] sm:$0xff]
  %v203 = vld [vmem:[%s2 + $0x70] sm:$0xff]
  %v204 = vld [vmem:[%s2 + $0x78] sm:$0xff]
  %205 = vmatpush.msra.mxu0 %v204
  %206 = vmatpush.msra.mxu0 %v203
  %207 = vmatpush.msra.mxu0 %v202
  %208 = vmatpush.msra.mxu0 %v201
  %209 = vmatpush.msra.mxu0 %v200
  %210 = vmatpush.msra.mxu0 %v199
  %211 = vmatpush.msra.mxu0 %v198
  %212 = vmatpush.msra.mxu0 %v197
  %213 = vmatpush.msra.mxu0 %v196
  %214 = vmatpush.msra.mxu0 %v195
  %215 = vmatpush.msra.mxu0 %v194
  %216 = vmatpush.msra.mxu0 %v193
  %217 = vmatpush.msra.mxu0 %v192
  %218 = vmatpush.msra.mxu0 %v191
  %219 = vmatpush.msra.mxu0 %v190
  %220 = vmatpush.msra.mxu0 %v189
  %221 = vmatmul.f32.gmra.mxu0 %v184
  %v222 = vpop.f32.mrf.mxu0
  %v223 = vadd.f32 0.0, %v222
  %224 = vdwg.mxu0
  %v225 = vadd.f32 %v188, %v223
  %v226 = vtanh.pop %v225
  %s227 = scalar_lea.vmem %s3, 32
  %228 = vst [vmem:[%s227] sm:$0xff] %v226
  %s229 = scalar_lea.vmem %s0, 40
  %v230 = vld [vmem:[%s229] sm:$0xff]
  %v231 = vld [vmem:[%s2] sm:$0xff]
  %v232 = vld [vmem:[%s2 + $0x8] sm:$0xff]
  %v233 = vld [vmem:[%s2 + $0x10] sm:$0xff]
  %v234 = vld [vmem:[%s2 + $0x18] sm:$0xff]
  %v235 = vld [vmem:[%s2 + $0x20] sm:$0xff]
  %v236 = vld [vmem:[%s2 + $0x28] sm:$0xff]
  %v237 = vld [vmem:[%s2 + $0x30] sm:$0xff]
  %v238 = vld [vmem:[%s2 + $0x38] sm:$0xff]
  %v239 = vld [vmem:[%s2 + $0x40] sm:$0xff]
  %v240 = vld [vmem:[%s2 + $0x48] sm:$0xff]
  %v241 = vld [vmem:[%s2 + $0x50] sm:$0xff]
  %v242 = vld [vmem:[%s2 + $0x58] sm:$0xff]
  %v243 = vld [vmem:[%s2 + $0x60] sm:$0xff]
  %v244 = vld [vmem:[%s2 + $0x68] sm:$0xff]
  %v245 = vld [vmem:[%s2 + $0x70] sm:$0xff]
  %v246 = vld [vmem:[%s2 + $0x78] sm:$0xff]
  %247 = vmatpush.msra.mxu0 %v246
  %248 = vmatpush.msra.mxu0 %v245
  %249 = vmatpush.msra.mxu0 %v244
  %250 = vmatpush.msra.mxu0 %v243
  %251 = vmatpush.msra.mxu0 %v242
  %252 = vmatpush.msra.mxu0 %v241
  %253 = vmatpush.msra.mxu0 %v240
  %254 = vmatpush.msra.mxu0 %v239
  %255 = vmatpush.msra.mxu0 %v238
  %256 = vmatpush.msra.mxu0 %v237
  %257 = vmatpush.msra.mxu0 %v236
  %258 = vmatpush.msra.mxu0 %v235
  %259 = vmatpush.msra.mxu0 %v234
  %260 = vmatpush.msra.mxu0 %v233
  %261 = vmatpush.msra.mxu0 %v232
  %262 = vmatpush.msra.mxu0 %v231
  %263 = vmatmul.f32.gmra.mxu0 %v226
  %v264 = vpop.f32.mrf.mxu0
  %v265 = vadd.f32 0.0, %v264
  %266 = vdwg.mxu0
  %v267 = vadd.f32 %v230, %v265
  %v268 = vtanh.pop %v267
  %s269 = scalar_lea.vmem %s3, 40
  %270 = vst [vmem:[%s269] sm:$0xff] %v268
  %s271 = scalar_lea.vmem %s0, 48
  %v272 = vld [vmem:[%s271] sm:$0xff]
  %v273 = vld [vmem:[%s2] sm:$0xff]
  %v274 = vld [vmem:[%s2 + $0x8] sm:$0xff]
  %v275 = vld [vmem:[%s2 + $0x10] sm:$0xff]
  %v276 = vld [vmem:[%s2 + $0x18] sm:$0xff]
  %v277 = vld [vmem:[%s2 + $0x20] sm:$0xff]
  %v278 = vld [vmem:[%s2 + $0x28] sm:$0xff]
  %v279 = vld [vmem:[%s2 + $0x30] sm:$0xff]
  %v280 = vld [vmem:[%s2 + $0x38] sm:$0xff]
  %v281 = vld [vmem:[%s2 + $0x40] sm:$0xff]
  %v282 = vld [vmem:[%s2 + $0x48] sm:$0xff]
  %v283 = vld [vmem:[%s2 + $0x50] sm:$0xff]
  %v284 = vld [vmem:[%s2 + $0x58] sm:$0xff]
  %v285 = vld [vmem:[%s2 + $0x60] sm:$0xff]
  %v286 = vld [vmem:[%s2 + $0x68] sm:$0xff]
  %v287 = vld [vmem:[%s2 + $0x70] sm:$0xff]
  %v288 = vld [vmem:[%s2 + $0x78] sm:$0xff]
  %289 = vmatpush.msra.mxu0 %v288
  %290 = vmatpush.msra.mxu0 %v287
  %291 = vmatpush.msra.mxu0 %v286
  %292 = vmatpush.msra.mxu0 %v285
  %293 = vmatpush.msra.mxu0 %v284
  %294 = vmatpush.msra.mxu0 %v283
  %295 = vmatpush.msra.mxu0 %v282
  %296 = vmatpush.msra.mxu0 %v281
  %297 = vmatpush.msra.mxu0 %v280
  %298 = vmatpush.msra.mxu0 %v279
  %299 = vmatpush.msra.mxu0 %v278
  %300 = vmatpush.msra.mxu0 %v277
  %301 = vmatpush.msra.mxu0 %v276
  %302 = vmatpush.msra.mxu0 %v275
  %303 = vmatpush.msra.mxu0 %v274
  %304 = vmatpush.msra.mxu0 %v273
  %305 = vmatmul.f32.gmra.mxu0 %v268
  %v306 = vpop.f32.mrf.mxu0
  %v307 = vadd.f32 0.0, %v306
  %308 = vdwg.mxu0
  %v309 = vadd.f32 %v272, %v307
  %v310 = vtanh.pop %v309
  %s311 = scalar_lea.vmem %s3, 48
  %312 = vst [vmem:[%s311] sm:$0xff] %v310
  %s313 = scalar_lea.vmem %s0, 56
  %v314 = vld [vmem:[%s313] sm:$0xff]
  %v315 = vld [vmem:[%s2] sm:$0xff]
  %v316 = vld [vmem:[%s2 + $0x8] sm:$0xff]
  %v317 = vld [vmem:[%s2 + $0x10] sm:$0xff]
  %v318 = vld [vmem:[%s2 + $0x18] sm:$0xff]
  %v319 = vld [vmem:[%s2 + $0x20] sm:$0xff]
  %v320 = vld [vmem:[%s2 + $0x28] sm:$0xff]
  %v321 = vld [vmem:[%s2 + $0x30] sm:$0xff]
  %v322 = vld [vmem:[%s2 + $0x38] sm:$0xff]
  %v323 = vld [vmem:[%s2 + $0x40] sm:$0xff]
  %v324 = vld [vmem:[%s2 + $0x48] sm:$0xff]
  %v325 = vld [vmem:[%s2 + $0x50] sm:$0xff]
  %v326 = vld [vmem:[%s2 + $0x58] sm:$0xff]
  %v327 = vld [vmem:[%s2 + $0x60] sm:$0xff]
  %v328 = vld [vmem:[%s2 + $0x68] sm:$0xff]
  %v329 = vld [vmem:[%s2 + $0x70] sm:$0xff]
  %v330 = vld [vmem:[%s2 + $0x78] sm:$0xff]
  %331 = vmatpush.msra.mxu0 %v330
  %332 = vmatpush.msra.mxu0 %v329
  %333 = vmatpush.msra.mxu0 %v328
  %334 = vmatpush.msra.mxu0 %v327
  %335 = vmatpush.msra.mxu0 %v326
  %336 = vmatpush.msra.mxu0 %v325
  %337 = vmatpush.msra.mxu0 %v324
  %338 = vmatpush.msra.mxu0 %v323
  %339 = vmatpush.msra.mxu0 %v322
  %340 = vmatpush.msra.mxu0 %v321
  %341 = vmatpush.msra.mxu0 %v320
  %342 = vmatpush.msra.mxu0 %v319
  %343 = vmatpush.msra.mxu0 %v318
  %344 = vmatpush.msra.mxu0 %v317
  %345 = vmatpush.msra.mxu0 %v316
  %346 = vmatpush.msra.mxu0 %v315
  %347 = vmatmul.f32.gmra.mxu0 %v310
  %v348 = vpop.f32.mrf.mxu0
  %v349 = vadd.f32 0.0, %v348
  %350 = vdwg.mxu0
  %v351 = vadd.f32 %v314, %v349
  %v352 = vtanh.pop %v351
  %s353 = scalar_lea.vmem %s3, 56
  %354 = vst [vmem:[%s353] sm:$0xff] %v352
  %355 = vst [vmem:[#allocation2] sm:$0xff] %v352
  // Predicated region
  $region18: #{rnn_forward_sequence.4} parent=0 // pred_check
    _
  $region19: #{rnn_forward_sequence.4} parent=0 // pred_check_branch
    %357 = sbr.rel (0) target = $region21
  $region20: #{rnn_forward_sequence.4} parent=0 // pred_region
    _
  $region21: #{rnn_forward_sequence.4} parent=0 // pred_fallthru
    _
  // Predicated region
  $region22: #{rnn_forward_sequence.4} parent=0 // pred_check
    _
  $region23: #{rnn_forward_sequence.4} parent=0 // pred_check_branch
    %359 = sbr.rel (0) target = $region25
  $region24: #{rnn_forward_sequence.4} parent=0 // pred_region
    _
  $region25: #{rnn_forward_sequence.4} parent=0 // pred_fallthru
    _

</llo_original>
